<compile_context>
chip_gen: v5e
topology: v5e:2x2
jax: 0.10.0
libtpu: 0.0.40
codegen_flags: <defaults>
</compile_context>

<pallas_src>
import jax
import jax.numpy as jnp
from jax.experimental import pallas as pl
from jax.experimental.pallas import tpu as pltpu

OBS_DIM = 16       # FlattenExtractor.features_dim for Box(16,)
N_ACTIONS = 6      # Discrete(6).n
ACT_EMB = 32       # action_embedding_dim
HIDDEN = 32        # hidden_size
T, B = 8, 2        # sequence length, batch

# Packed parameter slab layout: (P_ROWS, HIDDEN) f32, every section 8-row aligned.
ROW_W1S = 0                  # (16, 32)  W1 rows for the state features
ROW_W1A = OBS_DIM            # (6, 32)   folded  emb @ W1_action
ROW_B1 = 24                  # (1, 32)
ROW_W2 = 32                  # (32, 32)
ROW_B2 = 64                  # (1, 32)
ROW_W3T = 72                 # (1, 32)   W3 transposed
ROW_B3 = 80                  # scalar at [80, 0]
P_ROWS = 88


def _round_up(x, m):
    return (x + m - 1) // m * m


def reward_kernel(state_ref, act_ref, p_ref, o_ref):
    tm = state_ref.shape[0]
    state = state_ref[...]                               # (tm, 16) f32
    ids = act_ref[...]                                   # (tm, 1) int32

    # One-hot encoding built in-kernel (avoids an (N, 6) f32 HBM stream).
    iota = jax.lax.broadcasted_iota(jnp.int32, (tm, N_ACTIONS), 1)
    onehot = (iota == ids).astype(jnp.float32)           # (tm, 6)

    # Static slices into the single packed parameter slab (zero-cost views).
    w1s = p_ref[ROW_W1S:ROW_W1S + OBS_DIM, :]            # (16, 32)
    w1a = p_ref[ROW_W1A:ROW_W1A + N_ACTIONS, :]          # (6, 32)  = emb @ W1_act
    b1 = p_ref[ROW_B1:ROW_B1 + 1, :]                     # (1, 32)
    w2 = p_ref[ROW_W2:ROW_W2 + HIDDEN, :]                # (32, 32)
    b2 = p_ref[ROW_B2:ROW_B2 + 1, :]                     # (1, 32)
    w3t = p_ref[ROW_W3T:ROW_W3T + 1, :]                  # (1, 32)
    b3 = p_ref[ROW_B3:ROW_B3 + 1, 0:1]                   # (1, 1)

    # Linear(48, 32): concat([state, emb[a]]) @ W1 + b1
    #   == state @ W1_state + onehot @ (emb @ W1_action) + b1   (embedding folded)
    h1 = (jnp.dot(state, w1s, preferred_element_type=jnp.float32)
          + jnp.dot(onehot, w1a, preferred_element_type=jnp.float32)
          + b1)
    h1 = jnp.maximum(h1, 0.0)                            # ReLU

    # Linear(32, 32) + ReLU
    h2 = jnp.maximum(
        jnp.dot(h1, w2, preferred_element_type=jnp.float32) + b2, 0.0)

    # Linear(32, 1) as W3^T @ h2^T -> lane-dense (1, tm) result.
    row = jax.lax.dot_general(
        w3t, h2, dimension_numbers=(((1,), (1,)), ((), ())),
        preferred_element_type=jnp.float32) + b3         # (1, tm)
    o_ref[0] = row


def reward_net_forward(param_slab, state, action, next_state=None, done=None,
                       *, max_tile=1024):
    """Pallas implementation of RewardNet.forward. Returns (T, B, 1) float32."""
    t, b = action.shape[:2]
    n = t * b

    # Host-side glue: flatten extractor + raw int32 action ids (no one-hot here).
    state2d = state.reshape(n, -1).astype(jnp.float32)       # (N, 16)
    ids = action.reshape(n, 1).astype(jnp.int32)             # (N, 1)

    # Tile choice: one grid step when everything fits in a single tile; for large
    # N use 1024-row tiles (multiple of 8 sublanes, ~64 KiB state per tile).
    tm = _round_up(n, 8) if n <= max_tile else max_tile
    n_pad = _round_up(n, tm)
    if n_pad != n:
        state2d = jnp.pad(state2d, ((0, n_pad - n), (0, 0)))
        ids = jnp.pad(ids, ((0, n_pad - n), (0, 0)))         # pad action id 0 (valid)
    g = n_pad // tm

    out = pl.pallas_call(
        reward_kernel,
        out_shape=jax.ShapeDtypeStruct((g, 1, tm), jnp.float32),
        grid_spec=pltpu.PrefetchScalarGridSpec(
            num_scalar_prefetch=0,
            grid=(g,),
            in_specs=[
                pl.BlockSpec((tm, OBS_DIM), lambda i: (i, 0)),     # state rows
                pl.BlockSpec((tm, 1), lambda i: (i, 0)),           # action ids
                pl.BlockSpec((P_ROWS, HIDDEN), lambda i: (0, 0)),  # packed params
            ],
            out_specs=pl.BlockSpec((1, 1, tm), lambda i: (i, 0, 0)),  # lane-dense
        ),
        compiler_params=pltpu.CompilerParams(
            dimension_semantics=("parallel",)),
    )(state2d, ids, param_slab)

    return out.reshape(n_pad)[:n].reshape(t, b, 1)


def xavier_uniform(key, shape):
    fan_in, fan_out = shape
    bound = (6.0 / (fan_in + fan_out)) ** 0.5
    return jax.random.uniform(key, shape, jnp.float32, -bound, bound)


def init_params(key):
    """Deterministic init matching init_weights_tf2: xavier_uniform Linear weights,
    zero biases. nn.Embedding keeps its default N(0, 1) init."""
    k_emb, k1, k2, k3 = jax.random.split(key, 4)
    d_in = OBS_DIM + ACT_EMB  # 48
    return {
        "emb": jax.random.normal(k_emb, (N_ACTIONS, ACT_EMB), jnp.float32),
        "w1": xavier_uniform(k1, (d_in, HIDDEN)),
        "b1": jnp.zeros((HIDDEN,), jnp.float32),
        "w2": xavier_uniform(k2, (HIDDEN, HIDDEN)),
        "b2": jnp.zeros((HIDDEN,), jnp.float32),
        "w3": xavier_uniform(k3, (HIDDEN, 1)),
        "b3": jnp.zeros((1,), jnp.float32),
    }


def pack_params(p):
    """Fold the embedding into W1's action half and pack everything into one slab."""
    w1s = p["w1"][:OBS_DIM]                               # (16, 32)
    w1a_folded = p["emb"] @ p["w1"][OBS_DIM:]             # (6, 32)
    slab = jnp.zeros((P_ROWS, HIDDEN), jnp.float32)
    slab = slab.at[ROW_W1S:ROW_W1S + OBS_DIM].set(w1s)
    slab = slab.at[ROW_W1A:ROW_W1A + N_ACTIONS].set(w1a_folded)
    slab = slab.at[ROW_B1:ROW_B1 + 1].set(p["b1"].reshape(1, HIDDEN))
    slab = slab.at[ROW_W2:ROW_W2 + HIDDEN].set(p["w2"])
    slab = slab.at[ROW_B2:ROW_B2 + 1].set(p["b2"].reshape(1, HIDDEN))
    slab = slab.at[ROW_W3T:ROW_W3T + 1].set(p["w3"].reshape(1, HIDDEN))
    slab = slab.at[ROW_B3, 0].set(p["b3"].reshape(()))
    return slab


def reward_net_forward_ref(p, state, action):
    """Pure-JAX reference of the PyTorch forward semantics."""
    t, b = action.shape[:2]
    n = t * b
    state_feat = state.reshape(n, -1).astype(jnp.float32)
    act_feat = p["emb"][action.reshape(n)]
    x = jnp.concatenate([state_feat, act_feat], axis=-1)
    h1 = jnp.maximum(x @ p["w1"] + p["b1"], 0.0)
    h2 = jnp.maximum(h1 @ p["w2"] + p["b2"], 0.0)
    return (h2 @ p["w3"] + p["b3"]).reshape(t, b, 1)


if __name__ == "__main__":
    key = jax.random.PRNGKey(0)
    k_param, k_state, k_act = jax.random.split(key, 3)

    params = init_params(k_param)
    slab = pack_params(params)

    state = jax.random.normal(k_state, (T, B, OBS_DIM), jnp.float32)
    action = jax.random.randint(k_act, (T, B), 0, N_ACTIONS, jnp.int32)
    next_state = state                       # unused by this input config ('state','action')
    done = jnp.zeros((T, B), jnp.float32)    # unused by forward

    out = reward_net_forward(slab, state, action, next_state, done)
    out = jax.block_until_ready(out)

    ref = reward_net_forward_ref(params, state, action)
    assert out.shape == (T, B, 1)
    assert jnp.allclose(out, ref, atol=1e-4, rtol=1e-4), "mismatch vs JAX reference"

    print("KERNEL_OK")
</pallas_src>

<mosaic_0001>
module attributes {stable_mosaic.version = 11 : i64} {
  func.func @reward_kernel(%arg0: i32, %arg1: memref<16x16xf32, #tpu.memory_space<vmem>>, %arg2: memref<16x1xi32, #tpu.memory_space<vmem>>, %arg3: memref<88x32xf32, #tpu.memory_space<vmem>>, %arg4: memref<1x1x16xf32, #tpu.memory_space<vmem>>) attributes {dimension_semantics = [#tpu.dimension_semantics<parallel>], iteration_bounds = array<i64: 1>, scalar_prefetch = 0 : i64, scratch_operands = 0 : i64, tpu.core_type = #tpu.core_type<tc>, window_params = [{transform_indices = @transform_0, window_bounds = array<i64: 16, 16>}, {transform_indices = @transform_1, window_bounds = array<i64: 16, 1>}, {pipeline_mode = #tpu.pipeline_mode<synchronous>, transform_indices = @transform_2, window_bounds = array<i64: 88, 32>}, {transform_indices = @transform_3, window_bounds = array<i64: 1, 1, 16>}]} {
    %c0 = arith.constant 0 : index
    %c0_0 = arith.constant 0 : index
    %0 = vector.load %arg1[%c0, %c0_0] : memref<16x16xf32, #tpu.memory_space<vmem>>, vector<16x16xf32>
    %c0_1 = arith.constant 0 : index
    %c0_2 = arith.constant 0 : index
    %1 = vector.load %arg2[%c0_1, %c0_2] : memref<16x1xi32, #tpu.memory_space<vmem>>, vector<16x1xi32>
    %2 = tpu.iota {dimensions = array<i32: 1>} : vector<16x6xi32>
    %3 = vector.broadcast %1 : vector<16x1xi32> to vector<16x6xi32>
    %4 = arith.cmpi eq, %2, %3 : vector<16x6xi32>
    %5 = arith.extui %4 : vector<16x6xi1> to vector<16x6xi32>
    %6 = arith.sitofp %5 : vector<16x6xi32> to vector<16x6xf32>
    %c0_3 = arith.constant 0 : index
    %c0_4 = arith.constant 0 : index
    %7 = vector.load %arg3[%c0_3, %c0_4] : memref<88x32xf32, #tpu.memory_space<vmem>>, vector<16x32xf32>
    %c16 = arith.constant 16 : index
    %c0_5 = arith.constant 0 : index
    %8 = vector.load %arg3[%c16, %c0_5] : memref<88x32xf32, #tpu.memory_space<vmem>>, vector<6x32xf32>
    %c24 = arith.constant 24 : index
    %c0_6 = arith.constant 0 : index
    %9 = vector.load %arg3[%c24, %c0_6] : memref<88x32xf32, #tpu.memory_space<vmem>>, vector<1x32xf32>
    %c32 = arith.constant 32 : index
    %c0_7 = arith.constant 0 : index
    %10 = vector.load %arg3[%c32, %c0_7] : memref<88x32xf32, #tpu.memory_space<vmem>>, vector<32x32xf32>
    %c64 = arith.constant 64 : index
    %c0_8 = arith.constant 0 : index
    %11 = vector.load %arg3[%c64, %c0_8] : memref<88x32xf32, #tpu.memory_space<vmem>>, vector<1x32xf32>
    %c72 = arith.constant 72 : index
    %c0_9 = arith.constant 0 : index
    %12 = vector.load %arg3[%c72, %c0_9] : memref<88x32xf32, #tpu.memory_space<vmem>>, vector<1x32xf32>
    %c80 = arith.constant 80 : index
    %c0_10 = arith.constant 0 : index
    %13 = vector.load %arg3[%c80, %c0_10] : memref<88x32xf32, #tpu.memory_space<vmem>>, vector<1x1xf32>
    %cst = arith.constant dense<0.000000e+00> : vector<16x32xf32>
    %14 = tpu.matmul %0, %7, %cst {dimension_numbers = #tpu.dot_dimension_numbers<[1], [0], [0], [1], [0, 0, 1, 1], [], []>} : vector<16x16xf32>, vector<16x32xf32>, vector<16x32xf32> -> vector<16x32xf32>
    %cst_11 = arith.constant dense<0.000000e+00> : vector<16x32xf32>
    %15 = tpu.matmul %6, %8, %cst_11 {dimension_numbers = #tpu.dot_dimension_numbers<[1], [0], [0], [1], [0, 0, 1, 1], [], []>} : vector<16x6xf32>, vector<6x32xf32>, vector<16x32xf32> -> vector<16x32xf32>
    %16 = arith.addf %14, %15 : vector<16x32xf32>
    %17 = vector.broadcast %9 : vector<1x32xf32> to vector<16x32xf32>
    %18 = arith.addf %16, %17 : vector<16x32xf32>
    %cst_12 = arith.constant 0.000000e+00 : f32
    %19 = vector.broadcast %cst_12 : f32 to vector<16x32xf32>
    %20 = arith.maximumf %18, %19 : vector<16x32xf32>
    %cst_13 = arith.constant dense<0.000000e+00> : vector<16x32xf32>
    %21 = tpu.matmul %20, %10, %cst_13 {dimension_numbers = #tpu.dot_dimension_numbers<[1], [0], [0], [1], [0, 0, 1, 1], [], []>} : vector<16x32xf32>, vector<32x32xf32>, vector<16x32xf32> -> vector<16x32xf32>
    %22 = vector.broadcast %11 : vector<1x32xf32> to vector<16x32xf32>
    %23 = arith.addf %21, %22 : vector<16x32xf32>
    %cst_14 = arith.constant 0.000000e+00 : f32
    %24 = vector.broadcast %cst_14 : f32 to vector<16x32xf32>
    %25 = arith.maximumf %23, %24 : vector<16x32xf32>
    %cst_15 = arith.constant dense<0.000000e+00> : vector<1x16xf32>
    %26 = tpu.matmul %12, %25, %cst_15 {dimension_numbers = #tpu.dot_dimension_numbers<[1], [1], [0], [0], [0, 0, 1, 0], [], []>} : vector<1x32xf32>, vector<16x32xf32>, vector<1x16xf32> -> vector<1x16xf32>
    %27 = vector.broadcast %13 : vector<1x1xf32> to vector<1x16xf32>
    %28 = arith.addf %26, %27 : vector<1x16xf32>
    %c0_16 = arith.constant 0 : index
    %c0_17 = arith.constant 0 : index
    %c0_18 = arith.constant 0 : index
    %29 = vector.load %arg4[%c0_16, %c0_17, %c0_18] : memref<1x1x16xf32, #tpu.memory_space<vmem>>, vector<1x1x16xf32>
    %30 = vector.shape_cast %29 : vector<1x1x16xf32> to vector<1x16xf32>
    %31 = vector.shape_cast %28 : vector<1x16xf32> to vector<1x1x16xf32>
    tpu.vector_store %arg4[%c0_16, %c0_17, %c0_18], %31 {strides = array<i32>} : memref<1x1x16xf32, #tpu.memory_space<vmem>>, vector<1x1x16xf32>,
    return
  }
  func.func @transform_0(%arg0: i32) -> (i32, i32) {
    %c0_i32 = arith.constant 0 : i32
    %c0_i32_0 = arith.constant 0 : i32
    return %arg0, %c0_i32 : i32, i32
  }
  func.func @transform_1(%arg0: i32) -> (i32, i32) {
    %c0_i32 = arith.constant 0 : i32
    %c0_i32_0 = arith.constant 0 : i32
    return %arg0, %c0_i32 : i32, i32
  }
  func.func @transform_2(%arg0: i32) -> (i32, i32) {
    %c0_i32 = arith.constant 0 : i32
    %c0_i32_0 = arith.constant 0 : i32
    %c0_i32_1 = arith.constant 0 : i32
    return %c0_i32, %c0_i32_0 : i32, i32
  }
  func.func @transform_3(%arg0: i32) -> (i32, i32, i32) {
    %c0_i32 = arith.constant 0 : i32
    %c0_i32_0 = arith.constant 0 : i32
    %c0_i32_1 = arith.constant 0 : i32
    return %arg0, %c0_i32, %c0_i32_0 : i32, i32, i32
  }
}

</mosaic_0001>

<llo_original>
// kernel: tpu_custom_call.1
$region0: #{tpu_custom_call.1}
  #allocation0 [shape = 'u32[]', space=smem, size = 0x4, offset = 0x4, fixed_abs, tag = 'smem constant byte address 0x4 - core index']
  #allocation1 [shape = 'u32[72,128]{1,0:T(1,128)}', space=vmem, size = 0x9000, scoped, tag = 'internal scratch']
  %s0 = inlined_call_operand.vmem [shape: f32[16,16], index: 0, kind: input, shape index: {}]
  %s1 = inlined_call_operand.vmem [shape: s32[16,1], index: 1, kind: input, shape index: {}]
  %s2 = inlined_call_operand.vmem [shape: f32[88,32], index: 2, kind: input, shape index: {}]
  %s3 = inlined_call_operand.hbm [shape: f32[1,1,16], index: 3, kind: output, shape index: {}]
  %s4 = sld [smem:[#allocation0]]
  $region22: #{tpu_custom_call.1} parent=0
    _
  %s6 = ssub.s32 1, %s4
  %s7 = scalar_select 0, %s6, %s4
  $region1: #{tpu_custom_call.1} parent=0
    #allocation2 [shape = 'u8[512]{0}', space=vmem, size = 0x400, scoped, tag = 'output window, operand 0, single buffered']
    #allocation3 [shape = 's32[1]{0}', space=sflag, size = 0x4, scoped, tag = 'scoped memory for tpu_custom_call.1']
    %8 = vsyncpa [#allocation3], 0
    // Predicated region
    $region2: #{tpu_custom_call.1} parent=1 // pred_check
      _
    $region3: #{tpu_custom_call.1} parent=1 // pred_check_branch
      %10 = sbr.rel (0) target = $region5
    $region4: #{tpu_custom_call.1} parent=1 // pred_region
      _
    $region5: #{tpu_custom_call.1} parent=1 // pred_fallthru
      _
    // Predicated region
    $region6: #{tpu_custom_call.1} parent=1 // pred_check
      _
    $region7: #{tpu_custom_call.1} parent=1 // pred_check_branch
      %12 = sbr.rel (0) target = $region9
    $region8: #{tpu_custom_call.1} parent=1 // pred_region
      _
    $region9: #{tpu_custom_call.1} parent=1 // pred_fallthru
      _
    // Predicated region
    $region10: #{tpu_custom_call.1} parent=1 // pred_check
      _
    $region11: #{tpu_custom_call.1} parent=1 // pred_check_branch
      %14 = sbr.rel (0) target = $region13
    $region12: #{tpu_custom_call.1} parent=1 // pred_region
      _
    $region13: #{tpu_custom_call.1} parent=1 // pred_fallthru
      _
    %v15 = vld [vmem:[%s0] sm:$0xff]
    %v16 = vld [vmem:[%s0 + $0x8] sm:$0xff]
    %v17 = vld [vmem:[%s1] sm:$0xff]
    %v18 = vld [vmem:[%s1 + $0x8] sm:$0xff]
    %v19 = vlaneseq
    %v20 = vand.u32 %v19, 127
    %21 = vset.pattern.permute.xlu0 0
    %22 = vperm.xlu0 %21, %v17
    %v23 = vpop.permute.xlu0 %22
    %24 = vset.pattern.permute.xlu0 0
    %25 = vperm.xlu0 %24, %v18
    %v26 = vpop.permute.xlu0 %25
    %vm27 = vcmp.eq.s32.totalorder %v20, %v23
    %vm28 = vcmp.eq.s32.totalorder %v20, %v26
    %v29 = vsel %vm27, 1, 0
    %v30 = vsel %vm28, 1, 0
    %v31 = vcvt.s32.f32 %v29
    %v32 = vcvt.s32.f32 %v30
    %v33 = vld [vmem:[%s2] sm:$0xff]
    %v34 = vld [vmem:[%s2 + $0x8] sm:$0xff]
    %v35 = vld [vmem:[%s2 + $0x10] sm:$0x3f]
    %v36 = vld [vmem:[%s2 + $0x18] sm:$0x1]
    %v37 = vld [vmem:[%s2 + $0x20] sm:$0xff]
    %v38 = vld [vmem:[%s2 + $0x28] sm:$0xff]
    %v39 = vld [vmem:[%s2 + $0x30] sm:$0xff]
    %v40 = vld [vmem:[%s2 + $0x38] sm:$0xff]
    %v41 = vld [vmem:[%s2 + $0x40] sm:$0x1]
    %v42 = vld [vmem:[%s2 + $0x48] sm:$0x1]
    %v43 = vld [vmem:[%s2 + $0x50] sm:$0x1]
    %vm44 = vcmask 48128
    %v46 = vsel %vm44, %v31, 0
    %v49 = vsel %vm44, %v32, 0
    %vm51 = vcmask 1045504
    %v53 = vsel %vm51, %v35, 0
    %55 = vmatpush.msra.mxu0 0.0
    %56 = vmatpush.msra.mxu0 0.0
    %57 = vmatpush.msra.mxu0 0.0
    %58 = vmatpush.msra.mxu0 0.0
    %59 = vmatpush.msra.mxu0 0.0
    %60 = vmatpush.msra.mxu0 0.0
    %61 = vmatpush.msra.mxu0 0.0
    %62 = vmatpush.msra.mxu0 0.0
    %63 = vmatpush.msra.mxu0 0.0
    %64 = vmatpush.msra.mxu0 0.0
    %65 = vmatpush.msra.mxu0 0.0
    %66 = vmatpush.msra.mxu0 0.0
    %67 = vmatpush.msra.mxu0 0.0
    %68 = vmatpush.msra.mxu0 0.0
    %69 = vmatpush.msra.mxu0 0.0
    %70 = vmatpush.msra.mxu0 %v53
    %71 = vmatmul.f32.gmra.mxu0 %v46
    %v72 = vpop.f32.mrf.mxu0
    %v73 = vadd.f32 0.0, %v72
    %74 = vmatmul.f32.gmra.mxu0 %v49
    %v75 = vpop.f32.mrf.mxu0
    %v76 = vadd.f32 0.0, %v75
    %77 = vdwg.mxu0
    %vm78 = vcmask 130048
    %v80 = vsel %vm78, %v15, 0
    %v83 = vsel %vm78, %v16, 0
    %85 = vmatpush.msra.mxu0 0.0
    %86 = vmatpush.msra.mxu0 0.0
    %87 = vmatpush.msra.mxu0 0.0
    %88 = vmatpush.msra.mxu0 0.0
    %89 = vmatpush.msra.mxu0 0.0
    %90 = vmatpush.msra.mxu0 0.0
    %91 = vmatpush.msra.mxu0 0.0
    %92 = vmatpush.msra.mxu0 0.0
    %93 = vmatpush.msra.mxu0 0.0
    %94 = vmatpush.msra.mxu0 0.0
    %95 = vmatpush.msra.mxu0 0.0
    %96 = vmatpush.msra.mxu0 0.0
    %97 = vmatpush.msra.mxu0 0.0
    %98 = vmatpush.msra.mxu0 0.0
    %99 = vmatpush.msra.mxu0 %v34
    %100 = vmatpush.msra.mxu0 %v33
    %101 = vmatmul.f32.gmra.mxu0 %v80
    %v102 = vpop.f32.mrf.mxu0
    %v103 = vadd.f32 %v73, %v102
    %104 = vmatmul.f32.gmra.mxu0 %v83
    %v105 = vpop.f32.mrf.mxu0
    %v106 = vadd.f32 %v76, %v105
    %107 = vdwg.mxu0
    %v108 = vperm.slane %v36, 0
    %v109 = vadd.f32 %v103, %v108
    %v110 = vadd.f32 %v106, %v108
    %v111 = vmax.f32 %v109, 0.0
    %v112 = vmax.f32 %v110, 0.0
    %v113 = vperm.slane %v41, 0
    %vm114 = vcmask 261120
    %v116 = vsel %vm114, %v111, 0
    %v119 = vsel %vm114, %v112, 0
    %121 = vmatpush.msra.mxu0 0.0
    %122 = vmatpush.msra.mxu0 0.0
    %123 = vmatpush.msra.mxu0 0.0
    %124 = vmatpush.msra.mxu0 0.0
    %125 = vmatpush.msra.mxu0 0.0
    %126 = vmatpush.msra.mxu0 0.0
    %127 = vmatpush.msra.mxu0 0.0
    %128 = vmatpush.msra.mxu0 0.0
    %129 = vmatpush.msra.mxu0 0.0
    %130 = vmatpush.msra.mxu0 0.0
    %131 = vmatpush.msra.mxu0 0.0
    %132 = vmatpush.msra.mxu0 0.0
    %133 = vmatpush.msra.mxu0 %v40
    %134 = vmatpush.msra.mxu0 %v39
    %135 = vmatpush.msra.mxu0 %v38
    %136 = vmatpush.msra.mxu0 %v37
    %137 = vmatmul.f32.gmra.mxu0 %v116
    %v138 = vpop.f32.mrf.mxu0
    %v139 = vadd.f32 %v113, %v138
    %140 = vmatmul.f32.gmra.mxu0 %v119
    %v141 = vpop.f32.mrf.mxu0
    %v142 = vadd.f32 %v113, %v141
    %143 = vdwg.mxu0
    %v144 = vmax.f32 %v139, 0.0
    %v145 = vmax.f32 %v142, 0.0
    %147 = vset.pattern.permute.xlu0 0
    %148 = vperm.xlu0 %147, %v43
    %v149 = vpop.permute.xlu0 %148
    %v152 = vsel %vm114, %v42, 0
    %v155 = vsel %vm114, %v144, 0
    %v158 = vsel %vm114, %v145, 0
    %160 = vmatpush.xpose.msra.mxu0 0.0
    %161 = vmatpush.xpose.msra.mxu0 0.0
    %162 = vmatpush.xpose.msra.mxu0 0.0
    %163 = vmatpush.xpose.msra.mxu0 0.0
    %164 = vmatpush.xpose.msra.mxu0 0.0
    %165 = vmatpush.xpose.msra.mxu0 0.0
    %166 = vmatpush.xpose.msra.mxu0 0.0
    %167 = vmatpush.xpose.msra.mxu0 0.0
    %168 = vmatpush.xpose.msra.mxu0 0.0
    %169 = vmatpush.xpose.msra.mxu0 0.0
    %170 = vmatpush.xpose.msra.mxu0 0.0
    %171 = vmatpush.xpose.msra.mxu0 0.0
    %172 = vmatpush.xpose.msra.mxu0 0.0
    %173 = vmatpush.xpose.msra.mxu0 0.0
    %174 = vmatpush.xpose.msra.mxu0 %v158
    %175 = vmatpush.xpose.msra.mxu0 %v155
    %176 = vmatmul.f32.gmra.mxu0 %v152
    %v177 = vpop.f32.mrf.mxu0
    %v178 = vadd.f32 %v149, %v177
    %179 = vdwg.mxu0
    %vm180 = vcmask 122880
    %181 = vst.msk [vmem:[#allocation2] sm:$0x1] %vm180, %v178
    // Predicated region
    $region14: #{tpu_custom_call.1} parent=1 // pred_check
      _
    $region15: #{tpu_custom_call.1} parent=1 // pred_check_branch
      %183 = sbr.rel (0) target = $region17
    $region16: #{tpu_custom_call.1} parent=1 // pred_region
      %185 = vsyncadd [#allocation3], 0
      %s187 = sshll.u32 [#allocation2], 4
      %s188 = int_to_ptr.vmem [resolvable:$true] %s187
      %s189 = sshll.u32 %s3, 4
      %s190 = int_to_ptr.hbm [resolvable:$true] %s189
      %192 = dma.vmem_to_hbm [thread:$0]  %s188, 16, %s190, [#allocation3]
    $region17: #{tpu_custom_call.1} parent=1 // pred_fallthru
      _
    // Predicated region
    $region18: #{tpu_custom_call.1} parent=1 // pred_check
      _
    $region19: #{tpu_custom_call.1} parent=1 // pred_check_branch
      %194 = sbr.rel (0) target = $region21
    $region20: #{tpu_custom_call.1} parent=1 // pred_region
      %196 = dma.done [#allocation3], 16
    $region21: #{tpu_custom_call.1} parent=1 // pred_fallthru
      _
    %197 = vsyncpa [#allocation3], 1

</llo_original>
